<compile_context>
chip_gen: v7x
topology: tpu7x:2x2x1
jax: 0.10.0
libtpu: 0.0.40
codegen_flags: <defaults>
</compile_context>

<pallas_src>
import jax
import jax.numpy as jnp
from jax.experimental import pallas as pl
from jax.experimental.pallas import tpu as pltpu


# ------------------------------- Pallas kernel -------------------------------

def _make_row_stats_kernel(n_teachers: int, hw_total: int, hw_tile: int):
    """Per-row (row = one (batch, joint) pair) reductions over the hw axis, with the
    teacher mean computed in-register from the raw (n, rows, hw) targets."""
    needs_mask = (hw_total % hw_tile) != 0
    inv_n = 1.0 / float(n_teachers)

    def compute(x1_ref, t_ref, sq_ref, m1_ref, m2_ref, j, masked):
        v1 = x1_ref[...].astype(jnp.float32)

        # Fused teacher/ensemble mean, accumulated in f32 (n is a static Python int).
        acc = t_ref[0].astype(jnp.float32)
        for t in range(1, n_teachers):
            acc = acc + t_ref[t].astype(jnp.float32)
        v2 = acc * inv_n

        d = v1 - v2
        dd = d * d

        if masked:
            # Last hw block may overrun the array; mask out-of-range columns.
            col = jax.lax.broadcasted_iota(jnp.int32, v1.shape, 1) + j * hw_tile
            valid = col < hw_total
            dd = jnp.where(valid, dd, 0.0)
            v1 = jnp.where(valid, v1, -jnp.inf)
            v2 = jnp.where(valid, v2, -jnp.inf)

        sq_ref[...] += jnp.sum(dd, axis=-1, keepdims=True)
        m1_ref[...] = jnp.maximum(m1_ref[...], jnp.max(v1, axis=-1, keepdims=True))
        m2_ref[...] = jnp.maximum(m2_ref[...], jnp.max(v2, axis=-1, keepdims=True))

    def kernel(x1_ref, t_ref, sq_ref, m1_ref, m2_ref):
        # x1_ref : (R_TILE, HW_TILE)             block of preds.
        # t_ref  : (n, R_TILE, HW_TILE)          block of raw targets (all teachers).
        # sq_ref : (R_TILE, 1) f32, sum over hw of (preds - mean_n(targets))^2.
        # m1_ref : (R_TILE, 1) f32, max over hw of preds.
        # m2_ref : (R_TILE, 1) f32, max over hw of mean_n(targets).
        # Outputs are block-resident across the hw grid axis (accumulators).
        j = pl.program_id(1)

        @pl.when(j == 0)
        def _():
            sq_ref[...] = jnp.zeros(sq_ref.shape, sq_ref.dtype)
            m1_ref[...] = jnp.full(m1_ref.shape, -jnp.inf, m1_ref.dtype)
            m2_ref[...] = jnp.full(m2_ref.shape, -jnp.inf, m2_ref.dtype)

        if not needs_mask:
            compute(x1_ref, t_ref, sq_ref, m1_ref, m2_ref, j, masked=False)
        else:
            # Keep the masking (iota + compares + selects) off the hot path: only the
            # final, partial hw block pays for it.
            last = pl.num_programs(1) - 1

            @pl.when(j < last)
            def _():
                compute(x1_ref, t_ref, sq_ref, m1_ref, m2_ref, j, masked=False)

            @pl.when(j == last)
            def _():
                compute(x1_ref, t_ref, sq_ref, m1_ref, m2_ref, j, masked=True)

    return kernel


# ----------------------------- tiling / VMEM sizing ---------------------------

def _vmem_budget_bytes():
    """(pipelined-input budget, scoped-VMEM limit) derived from the chip's VMEM.

    v5e/v6e: 128 MiB physical  -> ~64 MiB of double-buffered input blocks, 96 MiB limit.
    v7x    :  64 MiB physical  -> ~35 MiB of double-buffered input blocks, ~54 MiB limit.
    Falls back to v7x-sized numbers if the query is unavailable (safe everywhere).
    """
    try:
        cap = int(pltpu.get_tpu_info().vmem_capacity_bytes)
        cap = max(cap, 32 * 1024 * 1024)
    except Exception:
        cap = 64 * 1024 * 1024
    budget = min(int(cap * 0.55), 64 * 1024 * 1024)
    limit = min(int(cap * 0.85), 96 * 1024 * 1024)
    return budget, limit


def _choose_tiles(rows, hw, preds_itemsize, targets_itemsize, n_teachers,
                  budget_bytes, min_row_tiles=2):
    """Pick (R_TILE, HW_TILE).

    Each grid step streams (1 + n_teachers) rows of `hw` elements per (b, k) row and
    Pallas double-buffers them, so pipelined-input bytes per row are
        2 * (preds_itemsize + n_teachers * targets_itemsize) * hw.
    R_TILE is a multiple of the sublane packing (16 for sub-32-bit inputs, else 8) or
    equals `rows`; HW_TILE is a multiple of 128 or equals `hw`.  When rows are
    plentiful we keep >= `min_row_tiles` row tiles so the 'parallel' row axis can be
    sharded across both TensorCores on v7x (no effect on single-TC chips).
    """
    sub = 8 if (preds_itemsize == 4 and targets_itemsize == 4) else 16
    bytes_per_row = 2 * (preds_itemsize + n_teachers * targets_itemsize) * hw

    rows_fit = budget_bytes // max(1, bytes_per_row)
    if rows_fit >= min(rows, sub):
        # Full hw axis resident per block (no edge masking ever): only tile rows.
        r_tile = min(rows, rows_fit)
        if min_row_tiles > 1 and rows >= min_row_tiles * sub:
            r_tile = min(r_tile, rows // min_row_tiles)
        if r_tile < rows:
            r_tile = max(sub, (r_tile // sub) * sub)
        return int(r_tile), int(hw)

    # hw alone overflows the budget: keep a thin row tile and tile the hw axis.
    r_tile = min(rows, sub)
    hw_fit = budget_bytes // (2 * (preds_itemsize + n_teachers * targets_itemsize) * r_tile)
    hw_tile = min(hw, max(128, (hw_fit // 128) * 128))
    return int(r_tile), int(hw_tile)


def _row_stats(preds2d, targets3d):
    """preds2d: (rows, hw); targets3d: (n, rows, hw), all in their native dtype.

    Returns (sum_hw (preds - mean_n(targets))^2, max_hw preds, max_hw mean_n(targets)),
    each (rows,) f32.  The teacher mean is computed inside the kernel.
    """
    rows, hw = preds2d.shape
    n_teachers = targets3d.shape[0]

    budget, vmem_limit = _vmem_budget_bytes()
    r_tile, hw_tile = _choose_tiles(
        rows, hw,
        jnp.dtype(preds2d.dtype).itemsize, jnp.dtype(targets3d.dtype).itemsize,
        n_teachers, budget)
    grid = (pl.cdiv(rows, r_tile), pl.cdiv(hw, hw_tile))

    preds_spec = pl.BlockSpec((r_tile, hw_tile), lambda r, j: (r, j))
    targets_spec = pl.BlockSpec((n_teachers, r_tile, hw_tile), lambda r, j: (0, r, j))
    out_spec = pl.BlockSpec((r_tile, 1), lambda r, j: (r, 0))
    out_sds = jax.ShapeDtypeStruct((rows, 1), jnp.float32)

    sq, m1, m2 = pl.pallas_call(
        _make_row_stats_kernel(n_teachers, hw, hw_tile),
        out_shape=(out_sds, out_sds, out_sds),
        grid_spec=pltpu.PrefetchScalarGridSpec(
            num_scalar_prefetch=0,
            grid=grid,
            in_specs=[preds_spec, targets_spec],
            out_specs=(out_spec, out_spec, out_spec),
        ),
        compiler_params=pltpu.CompilerParams(
            # Row axis 'parallel' (per-tile outputs -> v7x can use both TCs),
            # hw axis is the reduction -> 'arbitrary', last in the grid.
            dimension_semantics=("parallel", "arbitrary"),
            vmem_limit_bytes=vmem_limit,
        ),
    )(preds2d, targets3d)
    return sq[:, 0], m1[:, 0], m2[:, 0]


# ------------------------------ loss wrapper ---------------------------------

def joint_pseudo_loss3(preds, targets, sample_weight, *, n_stack=1, score_thr=0.5):
    """JointPseudoLoss3.forward for nStack == 1.

    preds         : (bs, k, h, w)     student heatmaps
    targets       : (n, bs, k, h, w)  n teacher/ensemble heatmap predictions
    sample_weight : (bs, 1) or (bs,)  per-sample weight (>0 marks pseudo samples)
    """
    if n_stack != 1:
        # TODO(synk): nStack > 1 path (preds[:, nIdx], targets[:, :, -1]) not implemented.
        raise NotImplementedError("only nStack == 1 is implemented")

    bs, k, h, w = preds.shape
    n_teachers = targets.shape[0]
    hw = h * w

    # Lane-dense 2D/3D views: one row per (batch, joint) pair.  The teacher mean is
    # fused into the kernel (accumulated in f32 in-register), so raw targets stream
    # straight from HBM exactly once and targets_mean is never materialized.
    x1 = preds.reshape(bs * k, hw)
    t = targets.reshape(n_teachers, bs * k, hw)

    sq_sum, v1_score, v2_score = _row_stats(x1, t)
    sq_sum = sq_sum.reshape(bs, k)
    v1_score = v1_score.reshape(bs, k)
    v2_score = v2_score.reshape(bs, k)

    # ---- tiny O(bs*k) epilogue ----
    sw = jnp.reshape(sample_weight, (bs, 1)).astype(jnp.float32)
    mse = sq_sum / float(hw)                               # mean over hw
    loss = mse * sw
    v1_mask = (v1_score >= score_thr).astype(jnp.float32)
    v2_mask = (v2_score >= score_thr).astype(jnp.float32)
    mask = v1_mask * v2_mask

    combined_loss_sum = jnp.sum(loss * mask)
    num_pseudo = jnp.sum(loss > 0).astype(jnp.int32)
    num_selected = jnp.sum(mask > 0).astype(jnp.int32)

    # NOTE: like the PyTorch reference, this is NaN if no sample has positive weight.
    unlabeled = (sw > 0).astype(jnp.float32)               # (bs, 1)
    n_unl = jnp.sum(unlabeled)
    v1_sel_mean = jnp.sum(v1_score * unlabeled, axis=0) / n_unl
    v2_sel_mean = jnp.sum(v2_score * unlabeled, axis=0) / n_unl
    joint_score_mean = 0.5 * (v1_sel_mean + v2_sel_mean)   # (k,)

    return (combined_loss_sum, num_pseudo, num_selected, joint_score_mean,
            score_thr, score_thr)


# ------------------------------ pure-JAX reference ---------------------------

def _reference(preds, targets, sample_weight, score_thr=0.5):
    bs, k, h, w = preds.shape
    targets_mean = jnp.mean(targets, axis=0)
    v1 = preds.reshape(bs, k, -1)
    v2 = targets_mean.reshape(bs, k, -1)
    loss = jnp.mean((v1 - v2) ** 2, axis=-1)
    sw = jnp.reshape(sample_weight, (bs, 1)).astype(jnp.float32)
    loss = loss * sw
    v1_score = jnp.max(v1, axis=-1)
    v2_score = jnp.max(v2, axis=-1)
    v1_mask = (v1_score >= score_thr).astype(jnp.float32)
    v2_mask = (v2_score >= score_thr).astype(jnp.float32)
    mask = v1_mask * v2_mask
    num_pseudo = int(jnp.sum(loss > 0))
    num_selected = int(jnp.sum(mask > 0))
    unl = jnp.reshape(sample_weight, (-1,)) > 0
    v1_u = v1_score[unl]
    v2_u = v2_score[unl]
    joint_score_mean = (jnp.mean(v1_u, axis=0) + jnp.mean(v2_u, axis=0)) / 2
    return (jnp.sum(loss * mask), num_pseudo, num_selected, joint_score_mean,
            score_thr, score_thr)


if __name__ == "__main__":
    key = jax.random.PRNGKey(0)
    k1, k2, k3, k4 = jax.random.split(key, 4)
    bs, kj, h, w, n_teacher = 2, 4, 16, 16, 2

    # Heatmap-like inputs with per-joint amplitudes so the 0.5 score threshold
    # is actually exercised (some joints above, some below).
    amp_p = jax.random.uniform(k3, (bs, kj, 1, 1), minval=0.2, maxval=1.0)
    amp_t = jax.random.uniform(k4, (bs, kj, 1, 1), minval=0.2, maxval=1.0)
    preds = jax.random.uniform(k1, (bs, kj, h, w), dtype=jnp.float32) * amp_p
    targets = (jax.random.uniform(k2, (n_teacher, bs, kj, h, w), dtype=jnp.float32)
               * amp_t[None])
    sample_weight = jnp.array([[1.0], [0.0]], dtype=jnp.float32)

    out = joint_pseudo_loss3(preds, targets, sample_weight)
    jax.block_until_ready((out[0], out[1], out[2], out[3]))

    ref = _reference(preds, targets, sample_weight)

    assert jnp.allclose(out[0], ref[0], rtol=1e-5, atol=1e-6), (out[0], ref[0])
    assert int(out[1]) == int(ref[1]), (out[1], ref[1])
    assert int(out[2]) == int(ref[2]), (out[2], ref[2])
    assert jnp.allclose(out[3], ref[3], rtol=1e-5, atol=1e-6), (out[3], ref[3])
    assert out[4] == ref[4] and out[5] == ref[5]

    # bf16 smoke run: the kernel is memory-bound, so production callers should keep
    # heatmaps bf16 end-to-end (casting to f32 happens in-register inside the kernel).
    out_bf16 = joint_pseudo_loss3(preds.astype(jnp.bfloat16),
                                  targets.astype(jnp.bfloat16), sample_weight)
    jax.block_until_ready((out_bf16[0], out_bf16[3]))
    assert bool(jnp.isfinite(out_bf16[0])), out_bf16[0]
    assert jnp.allclose(out_bf16[0], ref[0], rtol=5e-2, atol=5e-3), (out_bf16[0], ref[0])

    print("KERNEL_OK")
</pallas_src>

<mosaic_0001>
module attributes {stable_mosaic.version = 11 : i64} {
  func.func @kernel(%arg0: i32, %arg1: i32, %arg2: memref<8x256xf32, #tpu.memory_space<vmem>>, %arg3: memref<2x8x256xf32, #tpu.memory_space<vmem>>, %arg4: memref<8x1xf32, #tpu.memory_space<vmem>>, %arg5: memref<8x1xf32, #tpu.memory_space<vmem>>, %arg6: memref<8x1xf32, #tpu.memory_space<vmem>>) attributes {dimension_semantics = [#tpu.dimension_semantics<parallel>, #tpu.dimension_semantics<arbitrary>], iteration_bounds = array<i64: 1, 1>, scalar_prefetch = 0 : i64, scratch_operands = 0 : i64, tpu.core_type = #tpu.core_type<tc>, window_params = [{transform_indices = @transform_0, window_bounds = array<i64: 8, 256>}, {transform_indices = @transform_1, window_bounds = array<i64: 2, 8, 256>}, {transform_indices = @transform_2, window_bounds = array<i64: 8, 1>}, {transform_indices = @transform_3, window_bounds = array<i64: 8, 1>}, {transform_indices = @transform_4, window_bounds = array<i64: 8, 1>}]} {
    %c0_i32 = arith.constant 0 : i32
    %0 = arith.cmpi eq, %arg1, %c0_i32 : i32
    %1 = arith.extui %0 : i1 to i32
    %c0_i32_0 = arith.constant 0 : i32
    %2 = arith.cmpi ne, %1, %c0_i32_0 : i32
    scf.if %2 {
      %cst_22 = arith.constant 0.000000e+00 : f32
      %28 = vector.broadcast %cst_22 : f32 to vector<8x1xf32>
      %c0_23 = arith.constant 0 : index
      %c0_24 = arith.constant 0 : index
      %29 = vector.load %arg4[%c0_23, %c0_24] : memref<8x1xf32, #tpu.memory_space<vmem>>, vector<8x1xf32>
      tpu.vector_store %arg4[%c0_23, %c0_24], %28 {strides = array<i32>} : memref<8x1xf32, #tpu.memory_space<vmem>>, vector<8x1xf32>,
      %cst_25 = arith.constant 0xFF800000 : f32
      %30 = vector.broadcast %cst_25 : f32 to vector<8x1xf32>
      %c0_26 = arith.constant 0 : index
      %c0_27 = arith.constant 0 : index
      %31 = vector.load %arg5[%c0_26, %c0_27] : memref<8x1xf32, #tpu.memory_space<vmem>>, vector<8x1xf32>
      tpu.vector_store %arg5[%c0_26, %c0_27], %30 {strides = array<i32>} : memref<8x1xf32, #tpu.memory_space<vmem>>, vector<8x1xf32>,
      %cst_28 = arith.constant 0xFF800000 : f32
      %32 = vector.broadcast %cst_28 : f32 to vector<8x1xf32>
      %c0_29 = arith.constant 0 : index
      %c0_30 = arith.constant 0 : index
      %33 = vector.load %arg6[%c0_29, %c0_30] : memref<8x1xf32, #tpu.memory_space<vmem>>, vector<8x1xf32>
      tpu.vector_store %arg6[%c0_29, %c0_30], %32 {strides = array<i32>} : memref<8x1xf32, #tpu.memory_space<vmem>>, vector<8x1xf32>,
    } else {
    }
    %c0 = arith.constant 0 : index
    %c0_1 = arith.constant 0 : index
    %3 = vector.load %arg2[%c0, %c0_1] : memref<8x256xf32, #tpu.memory_space<vmem>>, vector<8x256xf32>
    %c0_2 = arith.constant 0 : index
    %c0_3 = arith.constant 0 : index
    %c0_4 = arith.constant 0 : index
    %4 = vector.load %arg3[%c0_2, %c0_3, %c0_4] : memref<2x8x256xf32, #tpu.memory_space<vmem>>, vector<1x8x256xf32>
    %5 = vector.shape_cast %4 : vector<1x8x256xf32> to vector<8x256xf32>
    %c1 = arith.constant 1 : index
    %c0_5 = arith.constant 0 : index
    %c0_6 = arith.constant 0 : index
    %6 = vector.load %arg3[%c1, %c0_5, %c0_6] : memref<2x8x256xf32, #tpu.memory_space<vmem>>, vector<1x8x256xf32>
    %7 = vector.shape_cast %6 : vector<1x8x256xf32> to vector<8x256xf32>
    %8 = arith.addf %5, %7 : vector<8x256xf32>
    %cst = arith.constant 5.000000e-01 : f32
    %9 = vector.broadcast %cst : f32 to vector<8x256xf32>
    %10 = arith.mulf %8, %9 : vector<8x256xf32>
    %11 = arith.subf %3, %10 : vector<8x256xf32>
    %12 = arith.mulf %11, %11 : vector<8x256xf32>
    %c0_7 = arith.constant 0 : index
    %c0_8 = arith.constant 0 : index
    %13 = vector.load %arg4[%c0_7, %c0_8] : memref<8x1xf32, #tpu.memory_space<vmem>>, vector<8x1xf32>
    %cst_9 = arith.constant dense<0.000000e+00> : vector<8xf32>
    %14 = vector.multi_reduction <add>, %12, %cst_9 [1] : vector<8x256xf32> to vector<8xf32>
    %15 = vector.shape_cast %14 : vector<8xf32> to vector<8x1xf32>
    %16 = arith.addf %13, %15 : vector<8x1xf32>
    %c0_10 = arith.constant 0 : index
    %c0_11 = arith.constant 0 : index
    %17 = vector.load %arg4[%c0_10, %c0_11] : memref<8x1xf32, #tpu.memory_space<vmem>>, vector<8x1xf32>
    tpu.vector_store %arg4[%c0_10, %c0_11], %16 {strides = array<i32>} : memref<8x1xf32, #tpu.memory_space<vmem>>, vector<8x1xf32>,
    %c0_12 = arith.constant 0 : index
    %c0_13 = arith.constant 0 : index
    %18 = vector.load %arg5[%c0_12, %c0_13] : memref<8x1xf32, #tpu.memory_space<vmem>>, vector<8x1xf32>
    %cst_14 = arith.constant dense<0xFF800000> : vector<8xf32>
    %19 = vector.multi_reduction <maximumf>, %3, %cst_14 [1] : vector<8x256xf32> to vector<8xf32>
    %20 = vector.shape_cast %19 : vector<8xf32> to vector<8x1xf32>
    %21 = arith.maximumf %18, %20 : vector<8x1xf32>
    %c0_15 = arith.constant 0 : index
    %c0_16 = arith.constant 0 : index
    %22 = vector.load %arg5[%c0_15, %c0_16] : memref<8x1xf32, #tpu.memory_space<vmem>>, vector<8x1xf32>
    tpu.vector_store %arg5[%c0_15, %c0_16], %21 {strides = array<i32>} : memref<8x1xf32, #tpu.memory_space<vmem>>, vector<8x1xf32>,
    %c0_17 = arith.constant 0 : index
    %c0_18 = arith.constant 0 : index
    %23 = vector.load %arg6[%c0_17, %c0_18] : memref<8x1xf32, #tpu.memory_space<vmem>>, vector<8x1xf32>
    %cst_19 = arith.constant dense<0xFF800000> : vector<8xf32>
    %24 = vector.multi_reduction <maximumf>, %10, %cst_19 [1] : vector<8x256xf32> to vector<8xf32>
    %25 = vector.shape_cast %24 : vector<8xf32> to vector<8x1xf32>
    %26 = arith.maximumf %23, %25 : vector<8x1xf32>
    %c0_20 = arith.constant 0 : index
    %c0_21 = arith.constant 0 : index
    %27 = vector.load %arg6[%c0_20, %c0_21] : memref<8x1xf32, #tpu.memory_space<vmem>>, vector<8x1xf32>
    tpu.vector_store %arg6[%c0_20, %c0_21], %26 {strides = array<i32>} : memref<8x1xf32, #tpu.memory_space<vmem>>, vector<8x1xf32>,
    return
  }
  func.func @transform_0(%arg0: i32, %arg1: i32) -> (i32, i32) {
    %c0_i32 = arith.constant 0 : i32
    return %arg0, %arg1 : i32, i32
  }
  func.func @transform_1(%arg0: i32, %arg1: i32) -> (i32, i32, i32) {
    %c0_i32 = arith.constant 0 : i32
    %c0_i32_0 = arith.constant 0 : i32
    return %c0_i32, %arg0, %arg1 : i32, i32, i32
  }
  func.func @transform_2(%arg0: i32, %arg1: i32) -> (i32, i32) {
    %c0_i32 = arith.constant 0 : i32
    %c0_i32_0 = arith.constant 0 : i32
    return %arg0, %c0_i32 : i32, i32
  }
  func.func @transform_3(%arg0: i32, %arg1: i32) -> (i32, i32) {
    %c0_i32 = arith.constant 0 : i32
    %c0_i32_0 = arith.constant 0 : i32
    return %arg0, %c0_i32 : i32, i32
  }
  func.func @transform_4(%arg0: i32, %arg1: i32) -> (i32, i32) {
    %c0_i32 = arith.constant 0 : i32
    %c0_i32_0 = arith.constant 0 : i32
    return %arg0, %c0_i32 : i32, i32
  }
}

</mosaic_0001>

<llo_original>
// kernel: tpu_custom_call.1
$region0: #{tpu_custom_call.1}
  #allocation0 [shape = 'u32[]', space=smem, size = 0x4, offset = 0x4, fixed_abs, tag = 'smem constant byte address 0x4 - core index']
  #allocation1 [shape = 'u32[144,128]{1,0:T(1,128)}', space=vmem, size = 0x12000, scoped, tag = 'internal scratch']
  %s0 = inlined_call_operand.hbm [shape: f32[8,256], index: 0, kind: input, shape index: {}]
  %s1 = inlined_call_operand.hbm [shape: f32[2,8,256], index: 1, kind: input, shape index: {}]
  %s2 = inlined_call_operand.vmem [shape: f32[8,1], index: 2, kind: output, shape index: {0}]
  %s3 = inlined_call_operand.vmem [shape: f32[8,1], index: 3, kind: output, shape index: {1}]
  %s4 = inlined_call_operand.vmem [shape: f32[8,1], index: 4, kind: output, shape index: {2}]
  %5 = xla_tuple %s2, %s3, %s4
  %s6 = sld [smem:[#allocation0]]
  $region46: #{tpu_custom_call.1} parent=0
    _
  %s8 = ssub.s32 1, %s6
  %s9 = scalar_select 0, %s8, %s6
  $region1: #{tpu_custom_call.1} parent=0
    #allocation2 [shape = 'u8[8192]{0}', space=vmem, size = 0x2000, scoped, tag = 'input window, operand 0, single buffered']
    #allocation3 [shape = 's32[1]{0}', space=sflag, size = 0x4, scoped, tag = 'scoped memory for tpu_custom_call.1']
    #allocation4 [shape = 'u8[16384]{0}', space=vmem, size = 0x4000, scoped, tag = 'input window, operand 1, single buffered']
    #allocation5 [shape = 's32[1]{0}', space=sflag, size = 0x4, scoped, tag = 'scoped memory for tpu_custom_call.1']
    %10 = vsyncpa [#allocation3], 0
    %11 = vsyncpa [#allocation5], 0
    // Predicated region
    $region2: #{tpu_custom_call.1} parent=1 // pred_check
      _
    $region3: #{tpu_custom_call.1} parent=1 // pred_check_branch
      %13 = sbr.rel (0) target = $region5
    $region4: #{tpu_custom_call.1} parent=1 // pred_region
      %s15 = ssub.s32 256, 256
      %16 = vsyncadd [#allocation3], %s15
      %s18 = sshll.u32 [#allocation2], 4
      %s19 = int_to_ptr.vmem [resolvable:$true] %s18
      %21 = dma.hbm_to_vmem [thread:$0]  %s0, 256, %s19, [#allocation3]
    $region5: #{tpu_custom_call.1} parent=1 // pred_fallthru
      _
    // Predicated region
    $region6: #{tpu_custom_call.1} parent=1 // pred_check
      _
    $region7: #{tpu_custom_call.1} parent=1 // pred_check_branch
      %23 = sbr.rel (0) target = $region9
    $region8: #{tpu_custom_call.1} parent=1 // pred_region
      %s25 = ssub.s32 512, 512
      %26 = vsyncadd [#allocation5], %s25
      %s27 = sshll.u32 [#allocation4], 4
      %s28 = int_to_ptr.vmem [resolvable:$true] %s27
      %33 = dma.hbm_to_vmem [thread:$0]  %s1, 512, %s28, [#allocation5], 256, 256, 16
    $region9: #{tpu_custom_call.1} parent=1 // pred_fallthru
      _
    // Predicated region
    $region10: #{tpu_custom_call.1} parent=1 // pred_check
      _
    $region11: #{tpu_custom_call.1} parent=1 // pred_check_branch
      %35 = sbr.rel (0) target = $region13
    $region12: #{tpu_custom_call.1} parent=1 // pred_region
      %36 = dma.done [#allocation3], 256
    $region13: #{tpu_custom_call.1} parent=1 // pred_fallthru
      _
    // Predicated region
    $region14: #{tpu_custom_call.1} parent=1 // pred_check
      _
    $region15: #{tpu_custom_call.1} parent=1 // pred_check_branch
      %38 = sbr.rel (0) target = $region17
    $region16: #{tpu_custom_call.1} parent=1 // pred_region
      %39 = dma.done [#allocation5], 512
    $region17: #{tpu_custom_call.1} parent=1 // pred_fallthru
      _
    %p40 = scmp.eq.s32.totalorder 0, 0
    // Predicated region
    $region18: #{tpu_custom_call.1} parent=1 // pred_check
      %p41 = pneg %p40
    $region19: #{tpu_custom_call.1} parent=1 // pred_check_branch
      %43 = sbr.rel (%p41) target = $region21
    $region20: #{tpu_custom_call.1} parent=1 // pred_region
      %vm44 = vcmask 7168
      %45 = vst.msk [vmem:[%s2] sm:$0xff] %vm44, 0.0
      %46 = vst.msk [vmem:[%s3] sm:$0xff] %vm44, -inf
      %47 = vst.msk [vmem:[%s4] sm:$0xff] %vm44, -inf
    $region21: #{tpu_custom_call.1} parent=1 // pred_fallthru
      _
    %v48 = vld [vmem:[#allocation2] sm:$0xff]
    %v49 = vld [vmem:[#allocation2 + $0x8] sm:$0xff]
    %v50 = vld [vmem:[#allocation4] sm:$0xff]
    %v51 = vld [vmem:[#allocation4 + $0x8] sm:$0xff]
    %s52 = scalar_lea.vmem [#allocation4], 16
    %v53 = vld [vmem:[%s52] sm:$0xff]
    %v54 = vld [vmem:[%s52 + $0x8] sm:$0xff]
    %v55 = vadd.f32 %v50, %v53
    %v56 = vadd.f32 %v51, %v54
    %v57 = vmul.f32 %v55, 0.5
    %v58 = vmul.f32 %v56, 0.5
    %v59 = vsub.f32 %v48, %v57
    %v60 = vsub.f32 %v49, %v58
    %v61 = vmul.f32 %v59, %v59
    %v62 = vmul.f32 %v60, %v60
    %v63 = vld [vmem:[%s2] sm:$0xff]
    %v64 = vadd.f32 %v61, %v62
    %65 = vadd.xlane.f32.xlu0 %v64
    %v66 = vpop.xlane.xlu0 %65
    %v67 = vadd.f32 %v63, %v66
    %vm68 = vcmask 7168
    %69 = vst.msk [vmem:[%s2] sm:$0xff] %vm68, %v67
    %v70 = vld [vmem:[%s3] sm:$0xff]
    %v71 = vmax.f32 %v48, %v49
    %72 = vmax.xlane.f32.xlu0 %v71
    %v73 = vpop.xlane.xlu0 %72
    %v74 = vmax.f32 %v70, %v73
    %75 = vst.msk [vmem:[%s3] sm:$0xff] %vm68, %v74
    %v76 = vld [vmem:[%s4] sm:$0xff]
    %v77 = vmax.f32 %v57, %v58
    %78 = vmax.xlane.f32.xlu0 %v77
    %v79 = vpop.xlane.xlu0 %78
    %v80 = vmax.f32 %v76, %v79
    %81 = vst.msk [vmem:[%s4] sm:$0xff] %vm68, %v80
    // Predicated region
    $region22: #{tpu_custom_call.1} parent=1 // pred_check
      _
    $region23: #{tpu_custom_call.1} parent=1 // pred_check_branch
      %83 = sbr.rel (0) target = $region25
    $region24: #{tpu_custom_call.1} parent=1 // pred_region
      _
    $region25: #{tpu_custom_call.1} parent=1 // pred_fallthru
      _
    // Predicated region
    $region26: #{tpu_custom_call.1} parent=1 // pred_check
      _
    $region27: #{tpu_custom_call.1} parent=1 // pred_check_branch
      %85 = sbr.rel (0) target = $region29
    $region28: #{tpu_custom_call.1} parent=1 // pred_region
      _
    $region29: #{tpu_custom_call.1} parent=1 // pred_fallthru
      _
    // Predicated region
    $region30: #{tpu_custom_call.1} parent=1 // pred_check
      _
    $region31: #{tpu_custom_call.1} parent=1 // pred_check_branch
      %87 = sbr.rel (0) target = $region33
    $region32: #{tpu_custom_call.1} parent=1 // pred_region
      _
    $region33: #{tpu_custom_call.1} parent=1 // pred_fallthru
      _
    // Predicated region
    $region34: #{tpu_custom_call.1} parent=1 // pred_check
      _
    $region35: #{tpu_custom_call.1} parent=1 // pred_check_branch
      %89 = sbr.rel (0) target = $region37
    $region36: #{tpu_custom_call.1} parent=1 // pred_region
      _
    $region37: #{tpu_custom_call.1} parent=1 // pred_fallthru
      _
    // Predicated region
    $region38: #{tpu_custom_call.1} parent=1 // pred_check
      _
    $region39: #{tpu_custom_call.1} parent=1 // pred_check_branch
      %91 = sbr.rel (0) target = $region41
    $region40: #{tpu_custom_call.1} parent=1 // pred_region
      _
    $region41: #{tpu_custom_call.1} parent=1 // pred_fallthru
      _
    // Predicated region
    $region42: #{tpu_custom_call.1} parent=1 // pred_check
      _
    $region43: #{tpu_custom_call.1} parent=1 // pred_check_branch
      %93 = sbr.rel (0) target = $region45
    $region44: #{tpu_custom_call.1} parent=1 // pred_region
      _
    $region45: #{tpu_custom_call.1} parent=1 // pred_fallthru
      _
    %94 = vsyncpa [#allocation3], 1
    %95 = vsyncpa [#allocation5], 1

</llo_original>
